<compile_context>
chip_gen: v7x
topology: tpu7x:2x2x1
jax: 0.10.0
libtpu: 0.0.40
codegen_flags: <defaults>
</compile_context>

<pallas_src>
import numpy as np
import jax
import jax.numpy as jnp
from jax.experimental import pallas as pl
from jax.experimental.pallas import tpu as pltpu

N_INPUT = 11
N_PAD = N_INPUT + 2   # 13, conv padding=1 baked into the input
P = N_INPUT // 2      # pooled length = 5
C = 32                # conv output channels
HALF = 256            # lane-aligned width of each (even/odd) conv half (C*P=160 padded)


def convnet_kernel(x_ref, wband_ref, bband_ref, wf1_ref, bf1_ref,
                   wa_ref, ba_ref, wb_ref, bb_ref,
                   wc_ref, bc_ref, wd_ref, bd_ref, out_ref):
    xpad = x_ref[...]                                              # (TB, 13) f32

    # All conv positions (even half | odd half), ReLU.
    conv = jnp.dot(xpad, wband_ref[...],
                   preferred_element_type=jnp.float32) + bband_ref[...]   # (TB, 512)
    conv = jnp.maximum(conv, 0.0)

    # MaxPool1d(k=2, s=2): lane-aligned max of the two 256-wide halves.
    m = jnp.maximum(conv[:, :HALF], conv[:, HALF:])                # (TB, 256), cols 0..159 valid

    # fc1 (+ReLU); weight rows 160..255 are zero so the padding is inert.
    h1 = jnp.maximum(jnp.dot(m, wf1_ref[...],
                             preferred_element_type=jnp.float32) + bf1_ref[...], 0.0)
    # fc2 = Linear(64,256)+ReLU, Linear(256,64)+ReLU, Linear(64,32)+ReLU, Linear(32,1)
    h2 = jnp.maximum(jnp.dot(h1, wa_ref[...],
                             preferred_element_type=jnp.float32) + ba_ref[...], 0.0)
    h3 = jnp.maximum(jnp.dot(h2, wb_ref[...],
                             preferred_element_type=jnp.float32) + bb_ref[...], 0.0)
    h4 = jnp.maximum(jnp.dot(h3, wc_ref[...],
                             preferred_element_type=jnp.float32) + bc_ref[...], 0.0)
    # Final Linear(32,1) on the VPU (avoid an N=1 MXU matmul).
    out_ref[...] = jnp.sum(h4 * wd_ref[...], axis=-1, keepdims=True) + bd_ref[...]


def convnet_forward(x, kp, tile_b=1024):
    """x: (B, 11) f32.  Returns (B, 1) f32.

    tile_b=1024 keeps per-tile intermediates ~5 MB (safe for v5e's 16 MiB
    default scoped VMEM); raise tile_b (and vmem_limit_bytes) on v7x if desired.
    """
    B = x.shape[0]
    xpad = jnp.pad(x.astype(jnp.float32), ((0, 0), (1, 1)))        # conv padding=1

    if B <= tile_b:
        tb, Bp = B, B
    else:
        tb = tile_b
        Bp = pl.cdiv(B, tb) * tb
        if Bp != B:
            xpad = jnp.pad(xpad, ((0, Bp - B), (0, 0)))

    weights = (kp["wband"], kp["bband"], kp["wf1"], kp["bf1"],
               kp["wa"], kp["ba"], kp["wb"], kp["bb"],
               kp["wc"], kp["bc"], kp["wd"], kp["bd"])

    def resident(w):   # full-array block, constant index -> stays in VMEM across grid
        return pl.BlockSpec(w.shape, lambda i: (0,) * w.ndim)

    in_specs = [pl.BlockSpec((tb, N_PAD), lambda i: (i, 0))] + [resident(w) for w in weights]
    out_specs = pl.BlockSpec((tb, 1), lambda i: (i, 0))

    flops = 2 * Bp * (N_PAD * 2 * HALF + HALF * 64 + 64 * 256 + 256 * 64 + 64 * 32 + 32)
    bytes_accessed = Bp * (N_PAD + 1) * 4 + sum(int(np.prod(w.shape)) * 4 for w in weights)

    out = pl.pallas_call(
        convnet_kernel,
        out_shape=jax.ShapeDtypeStruct((Bp, 1), jnp.float32),
        grid=(Bp // tb,),
        in_specs=in_specs,
        out_specs=out_specs,
        compiler_params=pltpu.CompilerParams(dimension_semantics=("parallel",)),
        cost_estimate=pl.CostEstimate(flops=flops, transcendentals=0,
                                      bytes_accessed=bytes_accessed),
    )(xpad, *weights)
    return out[:B]


def init_params(key):
    """Deterministic synthetic init.  Returns (torch-convention params, kernel params)."""
    ks = jax.random.split(key, 12)

    def u(k, shape, fan_in):
        s = 1.0 / jnp.sqrt(jnp.float32(fan_in))
        return jax.random.uniform(k, shape, jnp.float32, -s, s)

    # torch-convention shapes
    w1_t = u(ks[0], (C, 1, 3), 3)          # Conv1d weight (out, in, k)
    b1_t = u(ks[1], (C,), 3)
    wf1_t = u(ks[2], (64, C * P), C * P)   # Linear(160, 64) weight (out, in)
    bf1_t = u(ks[3], (64,), C * P)
    wa_t = u(ks[4], (256, 64), 64);  ba_t = u(ks[5], (256,), 64)
    wb_t = u(ks[6], (64, 256), 256); bb_t = u(ks[7], (64,), 256)
    wc_t = u(ks[8], (32, 64), 64);   bc_t = u(ks[9], (32,), 64)
    wd_t = u(ks[10], (1, 32), 32);   bd_t = u(ks[11], (1,), 32)

    torch_p = dict(w1=w1_t, b1=b1_t, wf1=wf1_t, bf1=bf1_t,
                   wa=wa_t, ba=ba_t, wb=wb_t, bb=bb_t,
                   wc=wc_t, bc=bc_t, wd=wd_t, bd=bd_t)

    # Banded conv weight: column layout [even positions (c*P+p) | pad | odd | pad].
    w1_np = np.asarray(w1_t[:, 0, :])      # (32, 3)  (channel, tap)
    b1_np = np.asarray(b1_t)
    Wb = np.zeros((N_PAD, 2 * HALF), np.float32)
    bband = np.zeros((1, 2 * HALF), np.float32)
    for c in range(C):
        for p in range(P):
            col = c * P + p                           # channel-major flatten order
            for t in range(3):
                Wb[2 * p + t, col] = w1_np[c, t]          # even conv position l = 2p
                Wb[2 * p + 1 + t, HALF + col] = w1_np[c, t]   # odd position l = 2p+1
            bband[0, col] = b1_np[c]
            bband[0, HALF + col] = b1_np[c]
    # Conv position 10 is intentionally never built (floor(11/2)=5 pooled pairs).

    # fc1 weight padded to K=256 (rows 160..255 zero), (in, out) layout.
    wf1_pad = np.zeros((HALF, 64), np.float32)
    wf1_pad[:C * P, :] = np.asarray(wf1_t).T

    kernel_p = dict(
        wband=jnp.asarray(Wb), bband=jnp.asarray(bband),
        wf1=jnp.asarray(wf1_pad), bf1=bf1_t[None, :],
        wa=wa_t.T, ba=ba_t[None, :],
        wb=wb_t.T, bb=bb_t[None, :],
        wc=wc_t.T, bc=bc_t[None, :],
        wd=wd_t,   bd=bd_t[None, :],   # wd kept as a (1, 32) row for the VPU reduce
    )
    return torch_p, kernel_p


def reference_forward(x, tp):
    """Plain-JAX replica of the PyTorch forward (NCL conv, channel-major flatten)."""
    B = x.shape[0]
    xpad = jnp.pad(x, ((0, 0), (1, 1)))                               # (B, 13)
    cols = jnp.stack([xpad[:, l:l + 3] for l in range(N_INPUT)], 1)   # (B, 11, 3)
    w1 = tp["w1"][:, 0, :]                                            # (32, 3)
    conv = jnp.einsum("blk,ck->bcl", cols, w1) + tp["b1"][None, :, None]  # (B, 32, 11)
    conv = jnp.maximum(conv, 0.0)
    pool = conv[:, :, :2 * P].reshape(B, C, P, 2).max(-1)             # (B, 32, 5)
    flat = pool.reshape(B, C * P)                                     # channel-major flatten
    h = jnp.maximum(flat @ tp["wf1"].T + tp["bf1"], 0.0)
    h = jnp.maximum(h @ tp["wa"].T + tp["ba"], 0.0)
    h = jnp.maximum(h @ tp["wb"].T + tp["bb"], 0.0)
    h = jnp.maximum(h @ tp["wc"].T + tp["bc"], 0.0)
    return h @ tp["wd"].T + tp["bd"]                                   # (B, 1)


if __name__ == "__main__":
    key = jax.random.PRNGKey(0)
    k_x, k_p = jax.random.split(key)
    B = 4
    x = jax.random.normal(k_x, (B, N_INPUT), jnp.float32)

    torch_p, kernel_p = init_params(k_p)

    out = convnet_forward(x, kernel_p)
    out = jax.block_until_ready(out)

    ref = reference_forward(x, torch_p)
    assert out.shape == (B, 1)
    assert jnp.allclose(out, ref, rtol=1e-4, atol=1e-5), (out, ref)
    print("KERNEL_OK")
</pallas_src>

<mosaic_0001>
module attributes {stable_mosaic.version = 11 : i64} {
  func.func @convnet_kernel(%arg0: i32, %arg1: memref<4x13xf32, #tpu.memory_space<vmem>>, %arg2: memref<13x512xf32, #tpu.memory_space<vmem>>, %arg3: memref<1x512xf32, #tpu.memory_space<vmem>>, %arg4: memref<256x64xf32, #tpu.memory_space<vmem>>, %arg5: memref<1x64xf32, #tpu.memory_space<vmem>>, %arg6: memref<64x256xf32, #tpu.memory_space<vmem>>, %arg7: memref<1x256xf32, #tpu.memory_space<vmem>>, %arg8: memref<256x64xf32, #tpu.memory_space<vmem>>, %arg9: memref<1x64xf32, #tpu.memory_space<vmem>>, %arg10: memref<64x32xf32, #tpu.memory_space<vmem>>, %arg11: memref<1x32xf32, #tpu.memory_space<vmem>>, %arg12: memref<1x32xf32, #tpu.memory_space<vmem>>, %arg13: memref<1x1xf32, #tpu.memory_space<vmem>>, %arg14: memref<4x1xf32, #tpu.memory_space<vmem>>) attributes {dimension_semantics = [#tpu.dimension_semantics<parallel>], iteration_bounds = array<i64: 1>, scalar_prefetch = 0 : i64, scratch_operands = 0 : i64, tpu.core_type = #tpu.core_type<tc>, window_params = [{transform_indices = @transform_0, window_bounds = array<i64: 4, 13>}, {pipeline_mode = #tpu.pipeline_mode<synchronous>, transform_indices = @transform_1, window_bounds = array<i64: 13, 512>}, {pipeline_mode = #tpu.pipeline_mode<synchronous>, transform_indices = @transform_2, window_bounds = array<i64: 1, 512>}, {pipeline_mode = #tpu.pipeline_mode<synchronous>, transform_indices = @transform_3, window_bounds = array<i64: 256, 64>}, {pipeline_mode = #tpu.pipeline_mode<synchronous>, transform_indices = @transform_4, window_bounds = array<i64: 1, 64>}, {pipeline_mode = #tpu.pipeline_mode<synchronous>, transform_indices = @transform_5, window_bounds = array<i64: 64, 256>}, {pipeline_mode = #tpu.pipeline_mode<synchronous>, transform_indices = @transform_6, window_bounds = array<i64: 1, 256>}, {pipeline_mode = #tpu.pipeline_mode<synchronous>, transform_indices = @transform_7, window_bounds = array<i64: 256, 64>}, {pipeline_mode = #tpu.pipeline_mode<synchronous>, transform_indices = @transform_8, window_bounds = array<i64: 1, 64>}, {pipeline_mode = #tpu.pipeline_mode<synchronous>, transform_indices = @transform_9, window_bounds = array<i64: 64, 32>}, {pipeline_mode = #tpu.pipeline_mode<synchronous>, transform_indices = @transform_10, window_bounds = array<i64: 1, 32>}, {pipeline_mode = #tpu.pipeline_mode<synchronous>, transform_indices = @transform_11, window_bounds = array<i64: 1, 32>}, {pipeline_mode = #tpu.pipeline_mode<synchronous>, transform_indices = @transform_12, window_bounds = array<i64: 1, 1>}, {transform_indices = @transform_13, window_bounds = array<i64: 4, 1>}]} {
    %c0 = arith.constant 0 : index
    %c0_0 = arith.constant 0 : index
    %0 = vector.load %arg1[%c0, %c0_0] : memref<4x13xf32, #tpu.memory_space<vmem>>, vector<4x13xf32>
    %c0_1 = arith.constant 0 : index
    %c0_2 = arith.constant 0 : index
    %1 = vector.load %arg2[%c0_1, %c0_2] : memref<13x512xf32, #tpu.memory_space<vmem>>, vector<13x512xf32>
    %cst = arith.constant dense<0.000000e+00> : vector<4x512xf32>
    %2 = tpu.matmul %0, %1, %cst {dimension_numbers = #tpu.dot_dimension_numbers<[1], [0], [0], [1], [0, 0, 1, 1], [], []>} : vector<4x13xf32>, vector<13x512xf32>, vector<4x512xf32> -> vector<4x512xf32>
    %c0_3 = arith.constant 0 : index
    %c0_4 = arith.constant 0 : index
    %3 = vector.load %arg3[%c0_3, %c0_4] : memref<1x512xf32, #tpu.memory_space<vmem>>, vector<1x512xf32>
    %4 = vector.broadcast %3 : vector<1x512xf32> to vector<4x512xf32>
    %5 = arith.addf %2, %4 : vector<4x512xf32>
    %cst_5 = arith.constant 0.000000e+00 : f32
    %6 = vector.broadcast %cst_5 : f32 to vector<4x512xf32>
    %7 = arith.maximumf %5, %6 : vector<4x512xf32>
    %8 = vector.extract_strided_slice %7 {offsets = [0, 0], sizes = [4, 256], strides = [1, 1]} : vector<4x512xf32> to vector<4x256xf32>
    %9 = vector.extract_strided_slice %7 {offsets = [0, 256], sizes = [4, 256], strides = [1, 1]} : vector<4x512xf32> to vector<4x256xf32>
    %10 = arith.maximumf %8, %9 : vector<4x256xf32>
    %c0_6 = arith.constant 0 : index
    %c0_7 = arith.constant 0 : index
    %11 = vector.load %arg4[%c0_6, %c0_7] : memref<256x64xf32, #tpu.memory_space<vmem>>, vector<256x64xf32>
    %cst_8 = arith.constant dense<0.000000e+00> : vector<4x64xf32>
    %12 = tpu.matmul %10, %11, %cst_8 {dimension_numbers = #tpu.dot_dimension_numbers<[1], [0], [0], [1], [0, 0, 1, 1], [], []>} : vector<4x256xf32>, vector<256x64xf32>, vector<4x64xf32> -> vector<4x64xf32>
    %c0_9 = arith.constant 0 : index
    %c0_10 = arith.constant 0 : index
    %13 = vector.load %arg5[%c0_9, %c0_10] : memref<1x64xf32, #tpu.memory_space<vmem>>, vector<1x64xf32>
    %14 = vector.broadcast %13 : vector<1x64xf32> to vector<4x64xf32>
    %15 = arith.addf %12, %14 : vector<4x64xf32>
    %cst_11 = arith.constant 0.000000e+00 : f32
    %16 = vector.broadcast %cst_11 : f32 to vector<4x64xf32>
    %17 = arith.maximumf %15, %16 : vector<4x64xf32>
    %c0_12 = arith.constant 0 : index
    %c0_13 = arith.constant 0 : index
    %18 = vector.load %arg6[%c0_12, %c0_13] : memref<64x256xf32, #tpu.memory_space<vmem>>, vector<64x256xf32>
    %cst_14 = arith.constant dense<0.000000e+00> : vector<4x256xf32>
    %19 = tpu.matmul %17, %18, %cst_14 {dimension_numbers = #tpu.dot_dimension_numbers<[1], [0], [0], [1], [0, 0, 1, 1], [], []>} : vector<4x64xf32>, vector<64x256xf32>, vector<4x256xf32> -> vector<4x256xf32>
    %c0_15 = arith.constant 0 : index
    %c0_16 = arith.constant 0 : index
    %20 = vector.load %arg7[%c0_15, %c0_16] : memref<1x256xf32, #tpu.memory_space<vmem>>, vector<1x256xf32>
    %21 = vector.broadcast %20 : vector<1x256xf32> to vector<4x256xf32>
    %22 = arith.addf %19, %21 : vector<4x256xf32>
    %cst_17 = arith.constant 0.000000e+00 : f32
    %23 = vector.broadcast %cst_17 : f32 to vector<4x256xf32>
    %24 = arith.maximumf %22, %23 : vector<4x256xf32>
    %c0_18 = arith.constant 0 : index
    %c0_19 = arith.constant 0 : index
    %25 = vector.load %arg8[%c0_18, %c0_19] : memref<256x64xf32, #tpu.memory_space<vmem>>, vector<256x64xf32>
    %cst_20 = arith.constant dense<0.000000e+00> : vector<4x64xf32>
    %26 = tpu.matmul %24, %25, %cst_20 {dimension_numbers = #tpu.dot_dimension_numbers<[1], [0], [0], [1], [0, 0, 1, 1], [], []>} : vector<4x256xf32>, vector<256x64xf32>, vector<4x64xf32> -> vector<4x64xf32>
    %c0_21 = arith.constant 0 : index
    %c0_22 = arith.constant 0 : index
    %27 = vector.load %arg9[%c0_21, %c0_22] : memref<1x64xf32, #tpu.memory_space<vmem>>, vector<1x64xf32>
    %28 = vector.broadcast %27 : vector<1x64xf32> to vector<4x64xf32>
    %29 = arith.addf %26, %28 : vector<4x64xf32>
    %cst_23 = arith.constant 0.000000e+00 : f32
    %30 = vector.broadcast %cst_23 : f32 to vector<4x64xf32>
    %31 = arith.maximumf %29, %30 : vector<4x64xf32>
    %c0_24 = arith.constant 0 : index
    %c0_25 = arith.constant 0 : index
    %32 = vector.load %arg10[%c0_24, %c0_25] : memref<64x32xf32, #tpu.memory_space<vmem>>, vector<64x32xf32>
    %cst_26 = arith.constant dense<0.000000e+00> : vector<4x32xf32>
    %33 = tpu.matmul %31, %32, %cst_26 {dimension_numbers = #tpu.dot_dimension_numbers<[1], [0], [0], [1], [0, 0, 1, 1], [], []>} : vector<4x64xf32>, vector<64x32xf32>, vector<4x32xf32> -> vector<4x32xf32>
    %c0_27 = arith.constant 0 : index
    %c0_28 = arith.constant 0 : index
    %34 = vector.load %arg11[%c0_27, %c0_28] : memref<1x32xf32, #tpu.memory_space<vmem>>, vector<1x32xf32>
    %35 = vector.broadcast %34 : vector<1x32xf32> to vector<4x32xf32>
    %36 = arith.addf %33, %35 : vector<4x32xf32>
    %cst_29 = arith.constant 0.000000e+00 : f32
    %37 = vector.broadcast %cst_29 : f32 to vector<4x32xf32>
    %38 = arith.maximumf %36, %37 : vector<4x32xf32>
    %c0_30 = arith.constant 0 : index
    %c0_31 = arith.constant 0 : index
    %39 = vector.load %arg12[%c0_30, %c0_31] : memref<1x32xf32, #tpu.memory_space<vmem>>, vector<1x32xf32>
    %40 = vector.broadcast %39 : vector<1x32xf32> to vector<4x32xf32>
    %41 = arith.mulf %38, %40 : vector<4x32xf32>
    %cst_32 = arith.constant dense<0.000000e+00> : vector<4xf32>
    %42 = vector.multi_reduction <add>, %41, %cst_32 [1] : vector<4x32xf32> to vector<4xf32>
    %43 = vector.shape_cast %42 : vector<4xf32> to vector<4x1xf32>
    %c0_33 = arith.constant 0 : index
    %c0_34 = arith.constant 0 : index
    %44 = vector.load %arg13[%c0_33, %c0_34] : memref<1x1xf32, #tpu.memory_space<vmem>>, vector<1x1xf32>
    %45 = vector.broadcast %44 : vector<1x1xf32> to vector<4x1xf32>
    %46 = arith.addf %43, %45 : vector<4x1xf32>
    %c0_35 = arith.constant 0 : index
    %c0_36 = arith.constant 0 : index
    %47 = vector.load %arg14[%c0_35, %c0_36] : memref<4x1xf32, #tpu.memory_space<vmem>>, vector<4x1xf32>
    tpu.vector_store %arg14[%c0_35, %c0_36], %46 {strides = array<i32>} : memref<4x1xf32, #tpu.memory_space<vmem>>, vector<4x1xf32>,
    return
  }
  func.func @transform_0(%arg0: i32) -> (i32, i32) {
    %c0_i32 = arith.constant 0 : i32
    %c0_i32_0 = arith.constant 0 : i32
    return %arg0, %c0_i32 : i32, i32
  }
  func.func @transform_1(%arg0: i32) -> (i32, i32) {
    %c0_i32 = arith.constant 0 : i32
    %c0_i32_0 = arith.constant 0 : i32
    %c0_i32_1 = arith.constant 0 : i32
    return %c0_i32, %c0_i32_0 : i32, i32
  }
  func.func @transform_2(%arg0: i32) -> (i32, i32) {
    %c0_i32 = arith.constant 0 : i32
    %c0_i32_0 = arith.constant 0 : i32
    %c0_i32_1 = arith.constant 0 : i32
    return %c0_i32, %c0_i32_0 : i32, i32
  }
  func.func @transform_3(%arg0: i32) -> (i32, i32) {
    %c0_i32 = arith.constant 0 : i32
    %c0_i32_0 = arith.constant 0 : i32
    %c0_i32_1 = arith.constant 0 : i32
    return %c0_i32, %c0_i32_0 : i32, i32
  }
  func.func @transform_4(%arg0: i32) -> (i32, i32) {
    %c0_i32 = arith.constant 0 : i32
    %c0_i32_0 = arith.constant 0 : i32
    %c0_i32_1 = arith.constant 0 : i32
    return %c0_i32, %c0_i32_0 : i32, i32
  }
  func.func @transform_5(%arg0: i32) -> (i32, i32) {
    %c0_i32 = arith.constant 0 : i32
    %c0_i32_0 = arith.constant 0 : i32
    %c0_i32_1 = arith.constant 0 : i32
    return %c0_i32, %c0_i32_0 : i32, i32
  }
  func.func @transform_6(%arg0: i32) -> (i32, i32) {
    %c0_i32 = arith.constant 0 : i32
    %c0_i32_0 = arith.constant 0 : i32
    %c0_i32_1 = arith.constant 0 : i32
    return %c0_i32, %c0_i32_0 : i32, i32
  }
  func.func @transform_7(%arg0: i32) -> (i32, i32) {
    %c0_i32 = arith.constant 0 : i32
    %c0_i32_0 = arith.constant 0 : i32
    %c0_i32_1 = arith.constant 0 : i32
    return %c0_i32, %c0_i32_0 : i32, i32
  }
  func.func @transform_8(%arg0: i32) -> (i32, i32) {
    %c0_i32 = arith.constant 0 : i32
    %c0_i32_0 = arith.constant 0 : i32
    %c0_i32_1 = arith.constant 0 : i32
    return %c0_i32, %c0_i32_0 : i32, i32
  }
  func.func @transform_9(%arg0: i32) -> (i32, i32) {
    %c0_i32 = arith.constant 0 : i32
    %c0_i32_0 = arith.constant 0 : i32
    %c0_i32_1 = arith.constant 0 : i32
    return %c0_i32, %c0_i32_0 : i32, i32
  }
  func.func @transform_10(%arg0: i32) -> (i32, i32) {
    %c0_i32 = arith.constant 0 : i32
    %c0_i32_0 = arith.constant 0 : i32
    %c0_i32_1 = arith.constant 0 : i32
    return %c0_i32, %c0_i32_0 : i32, i32
  }
  func.func @transform_11(%arg0: i32) -> (i32, i32) {
    %c0_i32 = arith.constant 0 : i32
    %c0_i32_0 = arith.constant 0 : i32
    %c0_i32_1 = arith.constant 0 : i32
    return %c0_i32, %c0_i32_0 : i32, i32
  }
  func.func @transform_12(%arg0: i32) -> (i32, i32) {
    %c0_i32 = arith.constant 0 : i32
    %c0_i32_0 = arith.constant 0 : i32
    %c0_i32_1 = arith.constant 0 : i32
    return %c0_i32, %c0_i32_0 : i32, i32
  }
  func.func @transform_13(%arg0: i32) -> (i32, i32) {
    %c0_i32 = arith.constant 0 : i32
    %c0_i32_0 = arith.constant 0 : i32
    return %arg0, %c0_i32 : i32, i32
  }
}

</mosaic_0001>

<llo_original>
// kernel: tpu_custom_call.1
$region0: #{tpu_custom_call.1}
  #allocation0 [shape = 'u32[]', space=smem, size = 0x4, offset = 0x4, fixed_abs, tag = 'smem constant byte address 0x4 - core index']
  #allocation1 [shape = 'u32[144,128]{1,0:T(1,128)}', space=vmem, size = 0x12000, scoped, tag = 'internal scratch']
  #allocation2 [shape = 'f32[1,1]{1,0:T(1,128)S(1)}', space=vmem, size = 0x200, scoped, tag = 'scoped memory for tpu_custom_call.1']
  %s0 = inlined_call_operand.vmem [shape: f32[4,13], index: 0, kind: input, shape index: {}]
  %s1 = inlined_call_operand.vmem [shape: f32[13,512], index: 1, kind: input, shape index: {}]
  %s2 = inlined_call_operand.vmem [shape: f32[1,512], index: 2, kind: input, shape index: {}]
  %s3 = inlined_call_operand.vmem [shape: f32[256,64], index: 3, kind: input, shape index: {}]
  %s4 = inlined_call_operand.vmem [shape: f32[1,64], index: 4, kind: input, shape index: {}]
  %s5 = inlined_call_operand.vmem [shape: f32[64,256], index: 5, kind: input, shape index: {}]
  %s6 = inlined_call_operand.vmem [shape: f32[1,256], index: 6, kind: input, shape index: {}]
  %s7 = inlined_call_operand.vmem [shape: f32[256,64], index: 7, kind: input, shape index: {}]
  %s8 = inlined_call_operand.vmem [shape: f32[1,64], index: 8, kind: input, shape index: {}]
  %s9 = inlined_call_operand.vmem [shape: f32[64,32], index: 9, kind: input, shape index: {}]
  %s10 = inlined_call_operand.vmem [shape: f32[1,32], index: 10, kind: input, shape index: {}]
  %s11 = inlined_call_operand.vmem [shape: f32[1,32], index: 11, kind: input, shape index: {}]
  %s12 = inlined_call_operand.<no memory space> [shape: f32[1,1], index: 12, kind: input, shape index: {}]
  %s13 = inlined_call_operand.vmem [shape: f32[4,1], index: 13, kind: output, shape index: {}]
  %s14 = sld [smem:[#allocation0]]
  $region62: #{tpu_custom_call.1} parent=0
    _
  %s16 = ssub.s32 1, %s14
  %s17 = scalar_select 0, %s16, %s14
  %v18 = vstv %s12
  %19 = vst [vmem:[#allocation2] sm:$0x1] %v18
  // Predicated region
  $region2: #{tpu_custom_call.1} parent=0 // pred_check
    _
  $region3: #{tpu_custom_call.1} parent=0 // pred_check_branch
    %21 = sbr.rel (0) target = $region5
  $region4: #{tpu_custom_call.1} parent=0 // pred_region
    _
  $region5: #{tpu_custom_call.1} parent=0 // pred_fallthru
    _
  // Predicated region
  $region6: #{tpu_custom_call.1} parent=0 // pred_check
    _
  $region7: #{tpu_custom_call.1} parent=0 // pred_check_branch
    %23 = sbr.rel (0) target = $region9
  $region8: #{tpu_custom_call.1} parent=0 // pred_region
    _
  $region9: #{tpu_custom_call.1} parent=0 // pred_fallthru
    _
  // Predicated region
  $region10: #{tpu_custom_call.1} parent=0 // pred_check
    _
  $region11: #{tpu_custom_call.1} parent=0 // pred_check_branch
    %25 = sbr.rel (0) target = $region13
  $region12: #{tpu_custom_call.1} parent=0 // pred_region
    _
  $region13: #{tpu_custom_call.1} parent=0 // pred_fallthru
    _
  // Predicated region
  $region14: #{tpu_custom_call.1} parent=0 // pred_check
    _
  $region15: #{tpu_custom_call.1} parent=0 // pred_check_branch
    %27 = sbr.rel (0) target = $region17
  $region16: #{tpu_custom_call.1} parent=0 // pred_region
    _
  $region17: #{tpu_custom_call.1} parent=0 // pred_fallthru
    _
  // Predicated region
  $region18: #{tpu_custom_call.1} parent=0 // pred_check
    _
  $region19: #{tpu_custom_call.1} parent=0 // pred_check_branch
    %29 = sbr.rel (0) target = $region21
  $region20: #{tpu_custom_call.1} parent=0 // pred_region
    _
  $region21: #{tpu_custom_call.1} parent=0 // pred_fallthru
    _
  // Predicated region
  $region22: #{tpu_custom_call.1} parent=0 // pred_check
    _
  $region23: #{tpu_custom_call.1} parent=0 // pred_check_branch
    %31 = sbr.rel (0) target = $region25
  $region24: #{tpu_custom_call.1} parent=0 // pred_region
    _
  $region25: #{tpu_custom_call.1} parent=0 // pred_fallthru
    _
  // Predicated region
  $region26: #{tpu_custom_call.1} parent=0 // pred_check
    _
  $region27: #{tpu_custom_call.1} parent=0 // pred_check_branch
    %33 = sbr.rel (0) target = $region29
  $region28: #{tpu_custom_call.1} parent=0 // pred_region
    _
  $region29: #{tpu_custom_call.1} parent=0 // pred_fallthru
    _
  // Predicated region
  $region30: #{tpu_custom_call.1} parent=0 // pred_check
    _
  $region31: #{tpu_custom_call.1} parent=0 // pred_check_branch
    %35 = sbr.rel (0) target = $region33
  $region32: #{tpu_custom_call.1} parent=0 // pred_region
    _
  $region33: #{tpu_custom_call.1} parent=0 // pred_fallthru
    _
  // Predicated region
  $region34: #{tpu_custom_call.1} parent=0 // pred_check
    _
  $region35: #{tpu_custom_call.1} parent=0 // pred_check_branch
    %37 = sbr.rel (0) target = $region37
  $region36: #{tpu_custom_call.1} parent=0 // pred_region
    _
  $region37: #{tpu_custom_call.1} parent=0 // pred_fallthru
    _
  // Predicated region
  $region38: #{tpu_custom_call.1} parent=0 // pred_check
    _
  $region39: #{tpu_custom_call.1} parent=0 // pred_check_branch
    %39 = sbr.rel (0) target = $region41
  $region40: #{tpu_custom_call.1} parent=0 // pred_region
    _
  $region41: #{tpu_custom_call.1} parent=0 // pred_fallthru
    _
  // Predicated region
  $region42: #{tpu_custom_call.1} parent=0 // pred_check
    _
  $region43: #{tpu_custom_call.1} parent=0 // pred_check_branch
    %41 = sbr.rel (0) target = $region45
  $region44: #{tpu_custom_call.1} parent=0 // pred_region
    _
  $region45: #{tpu_custom_call.1} parent=0 // pred_fallthru
    _
  // Predicated region
  $region46: #{tpu_custom_call.1} parent=0 // pred_check
    _
  $region47: #{tpu_custom_call.1} parent=0 // pred_check_branch
    %43 = sbr.rel (0) target = $region49
  $region48: #{tpu_custom_call.1} parent=0 // pred_region
    _
  $region49: #{tpu_custom_call.1} parent=0 // pred_fallthru
    _
  // Predicated region
  $region50: #{tpu_custom_call.1} parent=0 // pred_check
    _
  $region51: #{tpu_custom_call.1} parent=0 // pred_check_branch
    %45 = sbr.rel (0) target = $region53
  $region52: #{tpu_custom_call.1} parent=0 // pred_region
    _
  $region53: #{tpu_custom_call.1} parent=0 // pred_fallthru
    _
  %v46 = vld [vmem:[%s0] sm:$0xf]
  %v47 = vld [vmem:[%s1] sm:$0xff]
  %v48 = vld [vmem:[%s1 + $0x8] sm:$0xff]
  %v49 = vld [vmem:[%s1 + $0x10] sm:$0xff]
  %v50 = vld [vmem:[%s1 + $0x18] sm:$0xff]
  %v51 = vld [vmem:[%s1 + $0x20] sm:$0x1f]
  %v52 = vld [vmem:[%s1 + $0x28] sm:$0x1f]
  %v53 = vld [vmem:[%s1 + $0x30] sm:$0x1f]
  %v54 = vld [vmem:[%s1 + $0x38] sm:$0x1f]
  %v55 = vld [vmem:[%s2] sm:$0xf]
  %v57 = vlaneseq
  %v58 = vshrl.u32 %v57, 7
  %v59 = vsub.s32 0, %v58
  %v60 = vrot.slane %v55, %v59
  %v61 = vlaneseq
  %v62 = vshrl.u32 %v61, 7
  %v63 = vsub.s32 1, %v62
  %v64 = vrot.slane %v55, %v63
  %v65 = vlaneseq
  %v66 = vshrl.u32 %v65, 7
  %v67 = vsub.s32 2, %v66
  %v68 = vrot.slane %v55, %v67
  %v69 = vlaneseq
  %v70 = vshrl.u32 %v69, 7
  %v71 = vsub.s32 3, %v70
  %v72 = vrot.slane %v55, %v71
  %vm77 = vcmask 105472
  %v79 = vsel %vm77, %v46, 0
  %vm81 = vcmask 1044480
  %v83 = vsel %vm81, %v51, 0
  %v86 = vsel %vm81, %v52, 0
  %v89 = vsel %vm81, %v53, 0
  %v92 = vsel %vm81, %v54, 0
  %94 = vmatprep.subr.mxu0 %v48
  %95 = vmatpush1.msra.mxu0 %v47
  %96 = vmatprep.subr.mxu0 %v86
  %97 = vmatpush1.msra.mxu0 %v83
  %98 = vmatprep.subr.mxu0 0.0
  %99 = vmatpush1.msra.mxu0 0.0
  %100 = vmatprep.subr.mxu0 0.0
  %101 = vmatpush1.msra.mxu0 0.0
  %102 = vmatprep.subr.mxu0 0.0
  %103 = vmatpush1.msra.mxu0 0.0
  %104 = vmatprep.subr.mxu0 0.0
  %105 = vmatpush1.msra.mxu0 0.0
  %106 = vmatprep.subr.mxu0 0.0
  %107 = vmatpush1.msra.mxu0 0.0
  %108 = vmatprep.subr.mxu0 0.0
  %109 = vmatpush1.msra.mxu0 0.0
  %110 = vmatprep.subr.mxu0 0.0
  %111 = vmatpush1.msra.mxu0 0.0
  %112 = vmatprep.subr.mxu0 0.0
  %113 = vmatpush1.msra.mxu0 0.0
  %114 = vmatprep.subr.mxu0 0.0
  %115 = vmatpush1.msra.mxu0 0.0
  %116 = vmatprep.subr.mxu0 0.0
  %117 = vmatpush1.msra.mxu0 0.0
  %118 = vmatprep.subr.mxu0 0.0
  %119 = vmatpush1.msra.mxu0 0.0
  %120 = vmatprep.subr.mxu0 0.0
  %121 = vmatpush1.msra.mxu0 0.0
  %122 = vmatprep.subr.mxu0 0.0
  %123 = vmatpush1.msra.mxu0 0.0
  %124 = vmatprep.subr.mxu0 0.0
  %125 = vmatpush1.msra.mxu0 0.0
  %126 = vmatprep.subr.mxu0 0.0
  %127 = vmatpush1.msra.mxu0 0.0
  %128 = vmatprep.subr.mxu0 0.0
  %129 = vmatpush1.msra.mxu0 0.0
  %130 = vmatprep.subr.mxu0 0.0
  %131 = vmatpush1.msra.mxu0 0.0
  %132 = vmatprep.subr.mxu0 0.0
  %133 = vmatpush1.msra.mxu0 0.0
  %134 = vmatprep.subr.mxu0 0.0
  %135 = vmatpush1.msra.mxu0 0.0
  %136 = vmatprep.subr.mxu0 0.0
  %137 = vmatpush1.msra.mxu0 0.0
  %138 = vmatprep.subr.mxu0 0.0
  %139 = vmatpush1.msra.mxu0 0.0
  %140 = vmatprep.subr.mxu0 0.0
  %141 = vmatpush1.msra.mxu0 0.0
  %142 = vmatprep.subr.mxu0 0.0
  %143 = vmatpush1.msra.mxu0 0.0
  %144 = vmatprep.subr.mxu0 0.0
  %145 = vmatpush1.msra.mxu0 0.0
  %146 = vmatprep.subr.mxu0 0.0
  %147 = vmatpush1.msra.mxu0 0.0
  %148 = vmatprep.subr.mxu0 0.0
  %149 = vmatpush1.msra.mxu0 0.0
  %150 = vmatprep.subr.mxu0 0.0
  %151 = vmatpush1.msra.mxu0 0.0
  %152 = vmatprep.subr.mxu0 0.0
  %153 = vmatpush1.msra.mxu0 0.0
  %154 = vmatprep.subr.mxu0 0.0
  %155 = vmatpush1.msra.mxu0 0.0
  %156 = vmatprep.subr.mxu0 0.0
  %157 = vmatpush1.msra.mxu0 0.0
  %158 = vmatprep.mubr.f32.mxu0 0.0
  %159 = vmatmul.mubr.f32.gmra.mrb[0].mxu0 %v79
  %v160 = vpop.f32.mrb[0].mxu0
  %v161 = vadd.f32 %v60, %v160
  %v162 = vpop.f32.mrb[0].mxu0
  %v163 = vadd.f32 %v64, %v162
  %164 = vdwg.mxu0
  %165 = vmatprep.subr.mxu0 %v50
  %166 = vmatpush1.msra.mxu0 %v49
  %167 = vmatprep.subr.mxu0 %v92
  %168 = vmatpush1.msra.mxu0 %v89
  %169 = vmatprep.subr.mxu0 0.0
  %170 = vmatpush1.msra.mxu0 0.0
  %171 = vmatprep.subr.mxu0 0.0
  %172 = vmatpush1.msra.mxu0 0.0
  %173 = vmatprep.subr.mxu0 0.0
  %174 = vmatpush1.msra.mxu0 0.0
  %175 = vmatprep.subr.mxu0 0.0
  %176 = vmatpush1.msra.mxu0 0.0
  %177 = vmatprep.subr.mxu0 0.0
  %178 = vmatpush1.msra.mxu0 0.0
  %179 = vmatprep.subr.mxu0 0.0
  %180 = vmatpush1.msra.mxu0 0.0
  %181 = vmatprep.subr.mxu0 0.0
  %182 = vmatpush1.msra.mxu0 0.0
  %183 = vmatprep.subr.mxu0 0.0
  %184 = vmatpush1.msra.mxu0 0.0
  %185 = vmatprep.subr.mxu0 0.0
  %186 = vmatpush1.msra.mxu0 0.0
  %187 = vmatprep.subr.mxu0 0.0
  %188 = vmatpush1.msra.mxu0 0.0
  %189 = vmatprep.subr.mxu0 0.0
  %190 = vmatpush1.msra.mxu0 0.0
  %191 = vmatprep.subr.mxu0 0.0
  %192 = vmatpush1.msra.mxu0 0.0
  %193 = vmatprep.subr.mxu0 0.0
  %194 = vmatpush1.msra.mxu0 0.0
  %195 = vmatprep.subr.mxu0 0.0
  %196 = vmatpush1.msra.mxu0 0.0
  %197 = vmatprep.subr.mxu0 0.0
  %198 = vmatpush1.msra.mxu0 0.0
  %199 = vmatprep.subr.mxu0 0.0
  %200 = vmatpush1.msra.mxu0 0.0
  %201 = vmatprep.subr.mxu0 0.0
  %202 = vmatpush1.msra.mxu0 0.0
  %203 = vmatprep.subr.mxu0 0.0
  %204 = vmatpush1.msra.mxu0 0.0
  %205 = vmatprep.subr.mxu0 0.0
  %206 = vmatpush1.msra.mxu0 0.0
  %207 = vmatprep.subr.mxu0 0.0
  %208 = vmatpush1.msra.mxu0 0.0
  %209 = vmatprep.subr.mxu0 0.0
  %210 = vmatpush1.msra.mxu0 0.0
  %211 = vmatprep.subr.mxu0 0.0
  %212 = vmatpush1.msra.mxu0 0.0
  %213 = vmatprep.subr.mxu0 0.0
  %214 = vmatpush1.msra.mxu0 0.0
  %215 = vmatprep.subr.mxu0 0.0
  %216 = vmatpush1.msra.mxu0 0.0
  %217 = vmatprep.subr.mxu0 0.0
  %218 = vmatpush1.msra.mxu0 0.0
  %219 = vmatprep.subr.mxu0 0.0
  %220 = vmatpush1.msra.mxu0 0.0
  %221 = vmatprep.subr.mxu0 0.0
  %222 = vmatpush1.msra.mxu0 0.0
  %223 = vmatprep.subr.mxu0 0.0
  %224 = vmatpush1.msra.mxu0 0.0
  %225 = vmatprep.subr.mxu0 0.0
  %226 = vmatpush1.msra.mxu0 0.0
  %227 = vmatprep.subr.mxu0 0.0
  %228 = vmatpush1.msra.mxu0 0.0
  %229 = vmatprep.mubr.f32.mxu0 0.0
  %230 = vmatmul.mubr.f32.gmra.mrb[0].mxu0 %v79
  %v231 = vpop.f32.mrb[0].mxu0
  %v232 = vadd.f32 %v68, %v231
  %v233 = vpop.f32.mrb[0].mxu0
  %v234 = vadd.f32 %v72, %v233
  %235 = vdwg.mxu0
  %v236 = vmax.f32 %v161, 0.0
  %v237 = vmax.f32 %v163, 0.0
  %v238 = vmax.f32 %v232, 0.0
  %v239 = vmax.f32 %v234, 0.0
  %v240 = vmax.f32 %v236, %v238
  %v241 = vmax.f32 %v237, %v239
  %v242 = vld [vmem:[%s3] sm:$0xff]
  %v243 = vld [vmem:[%s3 + $0x8] sm:$0xff]
  %v244 = vld [vmem:[%s3 + $0x10] sm:$0xff]
  %v245 = vld [vmem:[%s3 + $0x18] sm:$0xff]
  %v246 = vld [vmem:[%s3 + $0x20] sm:$0xff]
  %v247 = vld [vmem:[%s3 + $0x28] sm:$0xff]
  %v248 = vld [vmem:[%s3 + $0x30] sm:$0xff]
  %v249 = vld [vmem:[%s3 + $0x38] sm:$0xff]
  %v250 = vld [vmem:[%s3 + $0x40] sm:$0xff]
  %v251 = vld [vmem:[%s3 + $0x48] sm:$0xff]
  %v252 = vld [vmem:[%s3 + $0x50] sm:$0xff]
  %v253 = vld [vmem:[%s3 + $0x58] sm:$0xff]
  %v254 = vld [vmem:[%s3 + $0x60] sm:$0xff]
  %v255 = vld [vmem:[%s3 + $0x68] sm:$0xff]
  %v256 = vld [vmem:[%s3 + $0x70] sm:$0xff]
  %v257 = vld [vmem:[%s3 + $0x78] sm:$0xff]
  %v258 = vld [vmem:[%s3 + $0x80] sm:$0xff]
  %v259 = vld [vmem:[%s3 + $0x88] sm:$0xff]
  %v260 = vld [vmem:[%s3 + $0x90] sm:$0xff]
  %v261 = vld [vmem:[%s3 + $0x98] sm:$0xff]
  %v262 = vld [vmem:[%s3 + $0xa0] sm:$0xff]
  %v263 = vld [vmem:[%s3 + $0xa8] sm:$0xff]
  %v264 = vld [vmem:[%s3 + $0xb0] sm:$0xff]
  %v265 = vld [vmem:[%s3 + $0xb8] sm:$0xff]
  %v266 = vld [vmem:[%s3 + $0xc0] sm:$0xff]
  %v267 = vld [vmem:[%s3 + $0xc8] sm:$0xff]
  %v268 = vld [vmem:[%s3 + $0xd0] sm:$0xff]
  %v269 = vld [vmem:[%s3 + $0xd8] sm:$0xff]
  %v270 = vld [vmem:[%s3 + $0xe0] sm:$0xff]
  %v271 = vld [vmem:[%s3 + $0xe8] sm:$0xff]
  %v272 = vld [vmem:[%s3 + $0xf0] sm:$0xff]
  %v273 = vld [vmem:[%s3 + $0xf8] sm:$0xff]
  %v274 = vld [vmem:[%s4] sm:$0x1]
  %v276 = vlaneseq
  %v277 = vshrl.u32 %v276, 7
  %v278 = vsub.s32 0, %v277
  %v279 = vrot.slane %v274, %v278
  %281 = vmatprep.subr.mxu0 0.0
  %282 = vmatpush1.msra.mxu0 %v242
  %283 = vmatprep.subr.mxu0 0.0
  %284 = vmatpush1.msra.mxu0 %v243
  %285 = vmatprep.subr.mxu0 0.0
  %286 = vmatpush1.msra.mxu0 %v244
  %287 = vmatprep.subr.mxu0 0.0
  %288 = vmatpush1.msra.mxu0 %v245
  %289 = vmatprep.subr.mxu0 0.0
  %290 = vmatpush1.msra.mxu0 %v246
  %291 = vmatprep.subr.mxu0 0.0
  %292 = vmatpush1.msra.mxu0 %v247
  %293 = vmatprep.subr.mxu0 0.0
  %294 = vmatpush1.msra.mxu0 %v248
  %295 = vmatprep.subr.mxu0 0.0
  %296 = vmatpush1.msra.mxu0 %v249
  %297 = vmatprep.subr.mxu0 0.0
  %298 = vmatpush1.msra.mxu0 %v250
  %299 = vmatprep.subr.mxu0 0.0
  %300 = vmatpush1.msra.mxu0 %v251
  %301 = vmatprep.subr.mxu0 0.0
  %302 = vmatpush1.msra.mxu0 %v252
  %303 = vmatprep.subr.mxu0 0.0
  %304 = vmatpush1.msra.mxu0 %v253
  %305 = vmatprep.subr.mxu0 0.0
  %306 = vmatpush1.msra.mxu0 %v254
  %307 = vmatprep.subr.mxu0 0.0
  %308 = vmatpush1.msra.mxu0 %v255
  %309 = vmatprep.subr.mxu0 0.0
  %310 = vmatpush1.msra.mxu0 %v256
  %311 = vmatprep.subr.mxu0 0.0
  %312 = vmatpush1.msra.mxu0 %v257
  %313 = vmatprep.subr.mxu0 0.0
  %314 = vmatpush1.msra.mxu0 %v258
  %315 = vmatprep.subr.mxu0 0.0
  %316 = vmatpush1.msra.mxu0 %v259
  %317 = vmatprep.subr.mxu0 0.0
  %318 = vmatpush1.msra.mxu0 %v260
  %319 = vmatprep.subr.mxu0 0.0
  %320 = vmatpush1.msra.mxu0 %v261
  %321 = vmatprep.subr.mxu0 0.0
  %322 = vmatpush1.msra.mxu0 %v262
  %323 = vmatprep.subr.mxu0 0.0
  %324 = vmatpush1.msra.mxu0 %v263
  %325 = vmatprep.subr.mxu0 0.0
  %326 = vmatpush1.msra.mxu0 %v264
  %327 = vmatprep.subr.mxu0 0.0
  %328 = vmatpush1.msra.mxu0 %v265
  %329 = vmatprep.subr.mxu0 0.0
  %330 = vmatpush1.msra.mxu0 %v266
  %331 = vmatprep.subr.mxu0 0.0
  %332 = vmatpush1.msra.mxu0 %v267
  %333 = vmatprep.subr.mxu0 0.0
  %334 = vmatpush1.msra.mxu0 %v268
  %335 = vmatprep.subr.mxu0 0.0
  %336 = vmatpush1.msra.mxu0 %v269
  %337 = vmatprep.subr.mxu0 0.0
  %338 = vmatpush1.msra.mxu0 %v270
  %339 = vmatprep.subr.mxu0 0.0
  %340 = vmatpush1.msra.mxu0 %v271
  %341 = vmatprep.subr.mxu0 0.0
  %342 = vmatpush1.msra.mxu0 %v272
  %343 = vmatprep.subr.mxu0 0.0
  %344 = vmatpush1.msra.mxu0 %v273
  %345 = vmatprep.mubr.f32.mxu0 %v241
  %346 = vmatmul.mubr.f32.gmra.mrb[0].mxu0 %v240
  %v347 = vpop.f32.mrb[0].mxu0
  %v348 = vadd.f32 %v279, %v347
  %v349 = vpop.f32.mrb[0].mxu0
  %350 = vdwg.mxu0
  %v351 = vmax.f32 %v348, 0.0
  %v352 = vld [vmem:[%s5] sm:$0xff]
  %v353 = vld [vmem:[%s5 + $0x8] sm:$0xff]
  %v354 = vld [vmem:[%s5 + $0x10] sm:$0xff]
  %v355 = vld [vmem:[%s5 + $0x18] sm:$0xff]
  %v356 = vld [vmem:[%s5 + $0x20] sm:$0xff]
  %v357 = vld [vmem:[%s5 + $0x28] sm:$0xff]
  %v358 = vld [vmem:[%s5 + $0x30] sm:$0xff]
  %v359 = vld [vmem:[%s5 + $0x38] sm:$0xff]
  %v360 = vld [vmem:[%s5 + $0x40] sm:$0xff]
  %v361 = vld [vmem:[%s5 + $0x48] sm:$0xff]
  %v362 = vld [vmem:[%s5 + $0x50] sm:$0xff]
  %v363 = vld [vmem:[%s5 + $0x58] sm:$0xff]
  %v364 = vld [vmem:[%s5 + $0x60] sm:$0xff]
  %v365 = vld [vmem:[%s5 + $0x68] sm:$0xff]
  %v366 = vld [vmem:[%s5 + $0x70] sm:$0xff]
  %v367 = vld [vmem:[%s5 + $0x78] sm:$0xff]
  %v368 = vld [vmem:[%s6] sm:$0x3]
  %v370 = vlaneseq
  %v371 = vshrl.u32 %v370, 7
  %v372 = vsub.s32 0, %v371
  %v373 = vrot.slane %v368, %v372
  %v374 = vlaneseq
  %v375 = vshrl.u32 %v374, 7
  %v376 = vsub.s32 1, %v375
  %v377 = vrot.slane %v368, %v376
  %vm380 = vcmask 523264
  %v382 = vsel %vm380, %v351, 0
  %384 = vmatprep.subr.mxu0 %v353
  %385 = vmatpush1.msra.mxu0 %v352
  %386 = vmatprep.subr.mxu0 %v355
  %387 = vmatpush1.msra.mxu0 %v354
  %388 = vmatprep.subr.mxu0 %v357
  %389 = vmatpush1.msra.mxu0 %v356
  %390 = vmatprep.subr.mxu0 %v359
  %391 = vmatpush1.msra.mxu0 %v358
  %392 = vmatprep.subr.mxu0 %v361
  %393 = vmatpush1.msra.mxu0 %v360
  %394 = vmatprep.subr.mxu0 %v363
  %395 = vmatpush1.msra.mxu0 %v362
  %396 = vmatprep.subr.mxu0 %v365
  %397 = vmatpush1.msra.mxu0 %v364
  %398 = vmatprep.subr.mxu0 %v367
  %399 = vmatpush1.msra.mxu0 %v366
  %400 = vmatprep.subr.mxu0 0.0
  %401 = vmatpush1.msra.mxu0 0.0
  %402 = vmatprep.subr.mxu0 0.0
  %403 = vmatpush1.msra.mxu0 0.0
  %404 = vmatprep.subr.mxu0 0.0
  %405 = vmatpush1.msra.mxu0 0.0
  %406 = vmatprep.subr.mxu0 0.0
  %407 = vmatpush1.msra.mxu0 0.0
  %408 = vmatprep.subr.mxu0 0.0
  %409 = vmatpush1.msra.mxu0 0.0
  %410 = vmatprep.subr.mxu0 0.0
  %411 = vmatpush1.msra.mxu0 0.0
  %412 = vmatprep.subr.mxu0 0.0
  %413 = vmatpush1.msra.mxu0 0.0
  %414 = vmatprep.subr.mxu0 0.0
  %415 = vmatpush1.msra.mxu0 0.0
  %416 = vmatprep.subr.mxu0 0.0
  %417 = vmatpush1.msra.mxu0 0.0
  %418 = vmatprep.subr.mxu0 0.0
  %419 = vmatpush1.msra.mxu0 0.0
  %420 = vmatprep.subr.mxu0 0.0
  %421 = vmatpush1.msra.mxu0 0.0
  %422 = vmatprep.subr.mxu0 0.0
  %423 = vmatpush1.msra.mxu0 0.0
  %424 = vmatprep.subr.mxu0 0.0
  %425 = vmatpush1.msra.mxu0 0.0
  %426 = vmatprep.subr.mxu0 0.0
  %427 = vmatpush1.msra.mxu0 0.0
  %428 = vmatprep.subr.mxu0 0.0
  %429 = vmatpush1.msra.mxu0 0.0
  %430 = vmatprep.subr.mxu0 0.0
  %431 = vmatpush1.msra.mxu0 0.0
  %432 = vmatprep.subr.mxu0 0.0
  %433 = vmatpush1.msra.mxu0 0.0
  %434 = vmatprep.subr.mxu0 0.0
  %435 = vmatpush1.msra.mxu0 0.0
  %436 = vmatprep.subr.mxu0 0.0
  %437 = vmatpush1.msra.mxu0 0.0
  %438 = vmatprep.subr.mxu0 0.0
  %439 = vmatpush1.msra.mxu0 0.0
  %440 = vmatprep.subr.mxu0 0.0
  %441 = vmatpush1.msra.mxu0 0.0
  %442 = vmatprep.subr.mxu0 0.0
  %443 = vmatpush1.msra.mxu0 0.0
  %444 = vmatprep.subr.mxu0 0.0
  %445 = vmatpush1.msra.mxu0 0.0
  %446 = vmatprep.subr.mxu0 0.0
  %447 = vmatpush1.msra.mxu0 0.0
  %448 = vmatprep.mubr.f32.mxu0 0.0
  %449 = vmatmul.mubr.f32.gmra.mrb[0].mxu0 %v382
  %v450 = vpop.f32.mrb[0].mxu0
  %v451 = vadd.f32 %v373, %v450
  %v452 = vpop.f32.mrb[0].mxu0
  %v453 = vadd.f32 %v377, %v452
  %454 = vdwg.mxu0
  %v455 = vmax.f32 %v451, 0.0
  %v456 = vmax.f32 %v453, 0.0
  %v457 = vld [vmem:[%s7] sm:$0xff]
  %v458 = vld [vmem:[%s7 + $0x8] sm:$0xff]
  %v459 = vld [vmem:[%s7 + $0x10] sm:$0xff]
  %v460 = vld [vmem:[%s7 + $0x18] sm:$0xff]
  %v461 = vld [vmem:[%s7 + $0x20] sm:$0xff]
  %v462 = vld [vmem:[%s7 + $0x28] sm:$0xff]
  %v463 = vld [vmem:[%s7 + $0x30] sm:$0xff]
  %v464 = vld [vmem:[%s7 + $0x38] sm:$0xff]
  %v465 = vld [vmem:[%s7 + $0x40] sm:$0xff]
  %v466 = vld [vmem:[%s7 + $0x48] sm:$0xff]
  %v467 = vld [vmem:[%s7 + $0x50] sm:$0xff]
  %v468 = vld [vmem:[%s7 + $0x58] sm:$0xff]
  %v469 = vld [vmem:[%s7 + $0x60] sm:$0xff]
  %v470 = vld [vmem:[%s7 + $0x68] sm:$0xff]
  %v471 = vld [vmem:[%s7 + $0x70] sm:$0xff]
  %v472 = vld [vmem:[%s7 + $0x78] sm:$0xff]
  %v473 = vld [vmem:[%s7 + $0x80] sm:$0xff]
  %v474 = vld [vmem:[%s7 + $0x88] sm:$0xff]
  %v475 = vld [vmem:[%s7 + $0x90] sm:$0xff]
  %v476 = vld [vmem:[%s7 + $0x98] sm:$0xff]
  %v477 = vld [vmem:[%s7 + $0xa0] sm:$0xff]
  %v478 = vld [vmem:[%s7 + $0xa8] sm:$0xff]
  %v479 = vld [vmem:[%s7 + $0xb0] sm:$0xff]
  %v480 = vld [vmem:[%s7 + $0xb8] sm:$0xff]
  %v481 = vld [vmem:[%s7 + $0xc0] sm:$0xff]
  %v482 = vld [vmem:[%s7 + $0xc8] sm:$0xff]
  %v483 = vld [vmem:[%s7 + $0xd0] sm:$0xff]
  %v484 = vld [vmem:[%s7 + $0xd8] sm:$0xff]
  %v485 = vld [vmem:[%s7 + $0xe0] sm:$0xff]
  %v486 = vld [vmem:[%s7 + $0xe8] sm:$0xff]
  %v487 = vld [vmem:[%s7 + $0xf0] sm:$0xff]
  %v488 = vld [vmem:[%s7 + $0xf8] sm:$0xff]
  %v489 = vld [vmem:[%s8] sm:$0x1]
  %v491 = vlaneseq
  %v492 = vshrl.u32 %v491, 7
  %v493 = vsub.s32 0, %v492
  %v494 = vrot.slane %v489, %v493
  %496 = vmatprep.subr.mxu0 0.0
  %497 = vmatpush1.msra.mxu0 %v457
  %498 = vmatprep.subr.mxu0 0.0
  %499 = vmatpush1.msra.mxu0 %v458
  %500 = vmatprep.subr.mxu0 0.0
  %501 = vmatpush1.msra.mxu0 %v459
  %502 = vmatprep.subr.mxu0 0.0
  %503 = vmatpush1.msra.mxu0 %v460
  %504 = vmatprep.subr.mxu0 0.0
  %505 = vmatpush1.msra.mxu0 %v461
  %506 = vmatprep.subr.mxu0 0.0
  %507 = vmatpush1.msra.mxu0 %v462
  %508 = vmatprep.subr.mxu0 0.0
  %509 = vmatpush1.msra.mxu0 %v463
  %510 = vmatprep.subr.mxu0 0.0
  %511 = vmatpush1.msra.mxu0 %v464
  %512 = vmatprep.subr.mxu0 0.0
  %513 = vmatpush1.msra.mxu0 %v465
  %514 = vmatprep.subr.mxu0 0.0
  %515 = vmatpush1.msra.mxu0 %v466
  %516 = vmatprep.subr.mxu0 0.0
  %517 = vmatpush1.msra.mxu0 %v467
  %518 = vmatprep.subr.mxu0 0.0
  %519 = vmatpush1.msra.mxu0 %v468
  %520 = vmatprep.subr.mxu0 0.0
  %521 = vmatpush1.msra.mxu0 %v469
  %522 = vmatprep.subr.mxu0 0.0
  %523 = vmatpush1.msra.mxu0 %v470
  %524 = vmatprep.subr.mxu0 0.0
  %525 = vmatpush1.msra.mxu0 %v471
  %526 = vmatprep.subr.mxu0 0.0
  %527 = vmatpush1.msra.mxu0 %v472
  %528 = vmatprep.subr.mxu0 0.0
  %529 = vmatpush1.msra.mxu0 %v473
  %530 = vmatprep.subr.mxu0 0.0
  %531 = vmatpush1.msra.mxu0 %v474
  %532 = vmatprep.subr.mxu0 0.0
  %533 = vmatpush1.msra.mxu0 %v475
  %534 = vmatprep.subr.mxu0 0.0
  %535 = vmatpush1.msra.mxu0 %v476
  %536 = vmatprep.subr.mxu0 0.0
  %537 = vmatpush1.msra.mxu0 %v477
  %538 = vmatprep.subr.mxu0 0.0
  %539 = vmatpush1.msra.mxu0 %v478
  %540 = vmatprep.subr.mxu0 0.0
  %541 = vmatpush1.msra.mxu0 %v479
  %542 = vmatprep.subr.mxu0 0.0
  %543 = vmatpush1.msra.mxu0 %v480
  %544 = vmatprep.subr.mxu0 0.0
  %545 = vmatpush1.msra.mxu0 %v481
  %546 = vmatprep.subr.mxu0 0.0
  %547 = vmatpush1.msra.mxu0 %v482
  %548 = vmatprep.subr.mxu0 0.0
  %549 = vmatpush1.msra.mxu0 %v483
  %550 = vmatprep.subr.mxu0 0.0
  %551 = vmatpush1.msra.mxu0 %v484
  %552 = vmatprep.subr.mxu0 0.0
  %553 = vmatpush1.msra.mxu0 %v485
  %554 = vmatprep.subr.mxu0 0.0
  %555 = vmatpush1.msra.mxu0 %v486
  %556 = vmatprep.subr.mxu0 0.0
  %557 = vmatpush1.msra.mxu0 %v487
  %558 = vmatprep.subr.mxu0 0.0
  %559 = vmatpush1.msra.mxu0 %v488
  %560 = vmatprep.mubr.f32.mxu0 %v456
  %561 = vmatmul.mubr.f32.gmra.mrb[0].mxu0 %v455
  %v562 = vpop.f32.mrb[0].mxu0
  %v563 = vadd.f32 %v494, %v562
  %v564 = vpop.f32.mrb[0].mxu0
  %565 = vdwg.mxu0
  %v566 = vmax.f32 %v563, 0.0
  %v567 = vld [vmem:[%s9] sm:$0xff]
  %v568 = vld [vmem:[%s9 + $0x8] sm:$0xff]
  %v569 = vld [vmem:[%s9 + $0x10] sm:$0xff]
  %v570 = vld [vmem:[%s9 + $0x18] sm:$0xff]
  %v571 = vld [vmem:[%s9 + $0x20] sm:$0xff]
  %v572 = vld [vmem:[%s9 + $0x28] sm:$0xff]
  %v573 = vld [vmem:[%s9 + $0x30] sm:$0xff]
  %v574 = vld [vmem:[%s9 + $0x38] sm:$0xff]
  %v575 = vld [vmem:[%s10] sm:$0x1]
  %v577 = vlaneseq
  %v578 = vshrl.u32 %v577, 7
  %v579 = vsub.s32 0, %v578
  %v580 = vrot.slane %v575, %v579
  %v583 = vsel %vm380, %v566, 0
  %585 = vmatprep.subr.mxu0 0.0
  %586 = vmatpush1.msra.mxu0 %v567
  %587 = vmatprep.subr.mxu0 0.0
  %588 = vmatpush1.msra.mxu0 %v568
  %589 = vmatprep.subr.mxu0 0.0
  %590 = vmatpush1.msra.mxu0 %v569
  %591 = vmatprep.subr.mxu0 0.0
  %592 = vmatpush1.msra.mxu0 %v570
  %593 = vmatprep.subr.mxu0 0.0
  %594 = vmatpush1.msra.mxu0 %v571
  %595 = vmatprep.subr.mxu0 0.0
  %596 = vmatpush1.msra.mxu0 %v572
  %597 = vmatprep.subr.mxu0 0.0
  %598 = vmatpush1.msra.mxu0 %v573
  %599 = vmatprep.subr.mxu0 0.0
  %600 = vmatpush1.msra.mxu0 %v574
  %601 = vmatprep.subr.mxu0 0.0
  %602 = vmatpush1.msra.mxu0 0.0
  %603 = vmatprep.subr.mxu0 0.0
  %604 = vmatpush1.msra.mxu0 0.0
  %605 = vmatprep.subr.mxu0 0.0
  %606 = vmatpush1.msra.mxu0 0.0
  %607 = vmatprep.subr.mxu0 0.0
  %608 = vmatpush1.msra.mxu0 0.0
  %609 = vmatprep.subr.mxu0 0.0
  %610 = vmatpush1.msra.mxu0 0.0
  %611 = vmatprep.subr.mxu0 0.0
  %612 = vmatpush1.msra.mxu0 0.0
  %613 = vmatprep.subr.mxu0 0.0
  %614 = vmatpush1.msra.mxu0 0.0
  %615 = vmatprep.subr.mxu0 0.0
  %616 = vmatpush1.msra.mxu0 0.0
  %617 = vmatprep.subr.mxu0 0.0
  %618 = vmatpush1.msra.mxu0 0.0
  %619 = vmatprep.subr.mxu0 0.0
  %620 = vmatpush1.msra.mxu0 0.0
  %621 = vmatprep.subr.mxu0 0.0
  %622 = vmatpush1.msra.mxu0 0.0
  %623 = vmatprep.subr.mxu0 0.0
  %624 = vmatpush1.msra.mxu0 0.0
  %625 = vmatprep.subr.mxu0 0.0
  %626 = vmatpush1.msra.mxu0 0.0
  %627 = vmatprep.subr.mxu0 0.0
  %628 = vmatpush1.msra.mxu0 0.0
  %629 = vmatprep.subr.mxu0 0.0
  %630 = vmatpush1.msra.mxu0 0.0
  %631 = vmatprep.subr.mxu0 0.0
  %632 = vmatpush1.msra.mxu0 0.0
  %633 = vmatprep.subr.mxu0 0.0
  %634 = vmatpush1.msra.mxu0 0.0
  %635 = vmatprep.subr.mxu0 0.0
  %636 = vmatpush1.msra.mxu0 0.0
  %637 = vmatprep.subr.mxu0 0.0
  %638 = vmatpush1.msra.mxu0 0.0
  %639 = vmatprep.subr.mxu0 0.0
  %640 = vmatpush1.msra.mxu0 0.0
  %641 = vmatprep.subr.mxu0 0.0
  %642 = vmatpush1.msra.mxu0 0.0
  %643 = vmatprep.subr.mxu0 0.0
  %644 = vmatpush1.msra.mxu0 0.0
  %645 = vmatprep.subr.mxu0 0.0
  %646 = vmatpush1.msra.mxu0 0.0
  %647 = vmatprep.subr.mxu0 0.0
  %648 = vmatpush1.msra.mxu0 0.0
  %649 = vmatprep.mubr.f32.mxu0 0.0
  %650 = vmatmul.mubr.f32.gmra.mrb[0].mxu0 %v583
  %v651 = vpop.f32.mrb[0].mxu0
  %v652 = vadd.f32 %v580, %v651
  %v653 = vpop.f32.mrb[0].mxu0
  %654 = vdwg.mxu0
  %v655 = vmax.f32 %v652, 0.0
  %v656 = vld [vmem:[%s11] sm:$0x1]
  %v658 = vlaneseq
  %v659 = vshrl.u32 %v658, 7
  %v660 = vsub.s32 0, %v659
  %v661 = vrot.slane %v656, %v660
  %v663 = vmul.f32 %v655, %v661
  %vm664 = vcmask 257024
  %v665 = vsel %vm664, %v663, 0.0
  %666 = vadd.xlane.f32.xlu0 %v665
  %v667 = vpop.xlane.xlu0 %666
  %v668 = vld [vmem:[#allocation2] sm:$0x1]
  %v670 = vlaneseq
  %v671 = vshrl.u32 %v670, 7
  %v672 = vsub.s32 0, %v671
  %v673 = vrot.slane %v668, %v672
  %v675 = vadd.f32 %v667, %v673
  %vm676 = vcmask 3072
  %677 = vst.msk [vmem:[%s13] sm:$0xf] %vm676, %v675
  // Predicated region
  $region54: #{tpu_custom_call.1} parent=0 // pred_check
    _
  $region55: #{tpu_custom_call.1} parent=0 // pred_check_branch
    %679 = sbr.rel (0) target = $region57
  $region56: #{tpu_custom_call.1} parent=0 // pred_region
    _
  $region57: #{tpu_custom_call.1} parent=0 // pred_fallthru
    _
  // Predicated region
  $region58: #{tpu_custom_call.1} parent=0 // pred_check
    _
  $region59: #{tpu_custom_call.1} parent=0 // pred_check_branch
    %681 = sbr.rel (0) target = $region61
  $region60: #{tpu_custom_call.1} parent=0 // pred_region
    _
  $region61: #{tpu_custom_call.1} parent=0 // pred_fallthru
    _

</llo_original>
